<compile_context>
chip_gen: v5e
topology: v5e:2x2
jax: 0.10.0
libtpu: 0.0.40
codegen_flags: <defaults>
</compile_context>

<pallas_src>
import math

import jax
import jax.numpy as jnp
from jax.experimental import pallas as pl
from jax.experimental.pallas import tpu as pltpu

# Small, self-consistent hyper-parameters.
VOCAB = 64
EMB_DIM = 32          # embedding_dim
MAX_LEN = 8           # max_len
HIDDEN = 256          # dense_1 output features (embedding_dim * max_len -> 256)
NUM_LABEL = 4
BATCH = 2
BL = BATCH * MAX_LEN  # rows are l-major: row = l * BATCH + b


def char_self_att_kernel(ids_ref, wqkv_emb_ref, bqkv_ref, mask_ref,
                         w1_ref, b1_ref, w2_ref, b2_ref, out_ref, ctx_ref):
    """Whole batch in one invocation. Rows are ordered l-major: row = l*B + b."""
    # ---- FastEmbedding + fused QKV projection in ONE matmul -----------------
    # (embedding table pre-folded into wqkv_emb; Q scale pre-folded too)
    ids = ids_ref[...]                                               # (BL, 1) int32
    vocab_iota = jax.lax.broadcasted_iota(jnp.int32, (BL, VOCAB), 1)
    onehot = (vocab_iota == ids).astype(jnp.float32)                 # (BL, VOCAB)
    qkv = jnp.dot(onehot, wqkv_emb_ref[...],
                  preferred_element_type=jnp.float32) + bqkv_ref[...]  # (BL, 3D)
    q = qkv[:, :EMB_DIM]
    k = qkv[:, EMB_DIM:2 * EMB_DIM]
    v = qkv[:, 2 * EMB_DIM:]

    # ---- self-attention over all rows, precomputed block-diagonal mask ------
    # scores = q @ k^T without materializing k.T (contract dim 1 of both).
    scores = jax.lax.dot_general(
        q, k, dimension_numbers=(((1,), (1,)), ((), ())),
        preferred_element_type=jnp.float32)                          # (BL, BL)
    scores = scores + mask_ref[...]
    scores = scores - jnp.max(scores, axis=-1, keepdims=True)
    p = jnp.exp(scores)
    inv_denom = pl.reciprocal(jnp.sum(p, axis=-1, keepdims=True), approx=True)
    attn = p * inv_denom
    ctx_ref[...] = jnp.dot(attn, v, preferred_element_type=jnp.float32)  # (BL, D)

    # ---- dense_1 as Sigma_l accumulation (no flatten / relayout needed) -----
    # l-major row layout => per-position rows are contiguous slices of ctx_ref.
    h = jnp.broadcast_to(b1_ref[...], (BATCH, HIDDEN)).astype(jnp.float32)
    for l in range(MAX_LEN):
        h = h + jnp.dot(
            ctx_ref[pl.ds(l * BATCH, BATCH), :],          # (B, D) rows of pos l
            w1_ref[pl.ds(l * EMB_DIM, EMB_DIM), :],       # (D, HIDDEN) block l
            preferred_element_type=jnp.float32)

    # ---- dense_2 --------------------------------------------------------------
    out_ref[...] = jnp.dot(h, w2_ref[...],
                           preferred_element_type=jnp.float32) + b2_ref[...]


def init_params(key):
    ks = jax.random.split(key, 10)
    scale = 0.05
    return {
        # FastEmbedding table
        "emb": scale * jax.random.normal(ks[0], (VOCAB, EMB_DIM), jnp.float32),
        # TextAtt Q/K/V projections (stored torch-style: (out, in))
        "wq": scale * jax.random.normal(ks[1], (EMB_DIM, EMB_DIM), jnp.float32),
        "bq": scale * jax.random.normal(ks[2], (EMB_DIM,), jnp.float32),
        "wk": scale * jax.random.normal(ks[3], (EMB_DIM, EMB_DIM), jnp.float32),
        "bk": scale * jax.random.normal(ks[4], (EMB_DIM,), jnp.float32),
        "wv": scale * jax.random.normal(ks[5], (EMB_DIM, EMB_DIM), jnp.float32),
        "bv": scale * jax.random.normal(ks[6], (EMB_DIM,), jnp.float32),
        # dense_1: Linear(EMB_DIM * MAX_LEN, 256), torch-style (out, in)
        "w1": scale * jax.random.normal(ks[7], (HIDDEN, EMB_DIM * MAX_LEN), jnp.float32),
        "b1": scale * jax.random.normal(ks[8], (HIDDEN,), jnp.float32),
        # dense_2: Linear(256, NUM_LABEL)
        "w2": scale * jax.random.normal(ks[9], (NUM_LABEL, HIDDEN), jnp.float32),
        "b2": jnp.zeros((NUM_LABEL,), jnp.float32),
    }


def prepare_params(p):
    """One-time weight layout prep (transpose / fuse / fold scale & embedding)."""
    s = 1.0 / math.sqrt(EMB_DIM)
    wqkv = jnp.concatenate([p["wq"].T * s, p["wk"].T, p["wv"].T], axis=1)  # (D, 3D)
    wqkv_emb = jnp.dot(p["emb"], wqkv)                                     # (VOCAB, 3D)
    bqkv = jnp.concatenate([p["bq"] * s, p["bk"], p["bv"]])[None, :]       # (1, 3D)
    # Block-diagonal additive attention mask for l-major rows (row = l*B + b):
    # rows/cols belong to the same example iff (index mod BATCH) matches.
    r = jnp.arange(BL)
    same = (r[:, None] % BATCH) == (r[None, :] % BATCH)
    mask = jnp.where(same, 0.0, -1e30).astype(jnp.float32)                 # (BL, BL)
    return {
        "wqkv_emb": wqkv_emb.astype(jnp.float32),
        "bqkv": bqkv,
        "mask": mask,
        "w1": p["w1"].T,             # (L*D, HIDDEN); row index = l*D + d
        "b1": p["b1"][None, :],      # (1, HIDDEN)
        "w2": p["w2"].T,             # (HIDDEN, NUM_LABEL)
        "b2": p["b2"][None, :],      # (1, NUM_LABEL)
    }


@jax.jit
def char_self_att_forward(x_ids, kp):
    # l-major row ordering: row = l * BATCH + b.
    ids = x_ids.T.reshape(BL, 1).astype(jnp.int32)
    return pl.pallas_call(
        char_self_att_kernel,
        out_shape=jax.ShapeDtypeStruct((BATCH, NUM_LABEL), jnp.float32),
        in_specs=[pl.BlockSpec(memory_space=pltpu.MemorySpace.VMEM)] * 8,
        out_specs=pl.BlockSpec(memory_space=pltpu.MemorySpace.VMEM),
        scratch_shapes=[pltpu.VMEM((BL, EMB_DIM), jnp.float32)],
    )(ids, kp["wqkv_emb"], kp["bqkv"], kp["mask"],
      kp["w1"], kp["b1"], kp["w2"], kp["b2"])


def reference_forward(x_ids, params):
    emb = jnp.take(params["emb"], x_ids, axis=0)
    q = emb @ params["wq"].T + params["bq"]
    k = emb @ params["wk"].T + params["bk"]
    v = emb @ params["wv"].T + params["bv"]
    scores = jnp.einsum("bld,bmd->blm", q, k) / math.sqrt(EMB_DIM)
    attn = jax.nn.softmax(scores, axis=-1)
    ctx = jnp.einsum("blm,bmd->bld", attn, v)
    flat = ctx.reshape(x_ids.shape[0], -1)
    h = flat @ params["w1"].T + params["b1"]
    return h @ params["w2"].T + params["b2"]


if __name__ == "__main__":
    key = jax.random.PRNGKey(0)
    k_param, k_data = jax.random.split(key)
    params = init_params(k_param)
    kernel_params = prepare_params(params)
    x_ids = jax.random.randint(k_data, (BATCH, MAX_LEN), 0, VOCAB, dtype=jnp.int32)

    out = jax.block_until_ready(char_self_att_forward(x_ids, kernel_params))
    ref = jax.block_until_ready(reference_forward(x_ids, params))

    assert out.shape == (BATCH, NUM_LABEL), out.shape
    # Slightly relaxed tolerance: softmax denominator uses the EUP approximate
    # reciprocal (pl.reciprocal(approx=True)).
    assert jnp.allclose(out, ref, atol=2e-3, rtol=2e-3), (out, ref)
    print("KERNEL_OK")
</pallas_src>

<mosaic_0001>
module attributes {stable_mosaic.version = 11 : i64} {
  func.func @char_self_att_kernel(%arg0: memref<16x1xi32, #tpu.memory_space<vmem>>, %arg1: memref<64x96xf32, #tpu.memory_space<vmem>>, %arg2: memref<1x96xf32, #tpu.memory_space<vmem>>, %arg3: memref<16x16xf32, #tpu.memory_space<vmem>>, %arg4: memref<256x256xf32, #tpu.memory_space<vmem>>, %arg5: memref<1x256xf32, #tpu.memory_space<vmem>>, %arg6: memref<256x4xf32, #tpu.memory_space<vmem>>, %arg7: memref<1x4xf32, #tpu.memory_space<vmem>>, %arg8: memref<2x4xf32, #tpu.memory_space<vmem>>, %arg9: memref<16x32xf32, #tpu.memory_space<vmem>>) attributes {dimension_semantics = [], scalar_prefetch = 0 : i64, scratch_operands = 1 : i64, tpu.core_type = #tpu.core_type<tc>} {
    %c0 = arith.constant 0 : index
    %c0_0 = arith.constant 0 : index
    %0 = vector.load %arg0[%c0, %c0_0] : memref<16x1xi32, #tpu.memory_space<vmem>>, vector<16x1xi32>
    %1 = tpu.iota {dimensions = array<i32: 1>} : vector<16x64xi32>
    %2 = vector.broadcast %0 : vector<16x1xi32> to vector<16x64xi32>
    %3 = arith.cmpi eq, %1, %2 : vector<16x64xi32>
    %4 = arith.extui %3 : vector<16x64xi1> to vector<16x64xi32>
    %5 = arith.sitofp %4 : vector<16x64xi32> to vector<16x64xf32>
    %c0_1 = arith.constant 0 : index
    %c0_2 = arith.constant 0 : index
    %6 = vector.load %arg1[%c0_1, %c0_2] : memref<64x96xf32, #tpu.memory_space<vmem>>, vector<64x96xf32>
    %cst = arith.constant dense<0.000000e+00> : vector<16x96xf32>
    %7 = tpu.matmul %5, %6, %cst {dimension_numbers = #tpu.dot_dimension_numbers<[1], [0], [0], [1], [0, 0, 1, 1], [], []>} : vector<16x64xf32>, vector<64x96xf32>, vector<16x96xf32> -> vector<16x96xf32>
    %c0_3 = arith.constant 0 : index
    %c0_4 = arith.constant 0 : index
    %8 = vector.load %arg2[%c0_3, %c0_4] : memref<1x96xf32, #tpu.memory_space<vmem>>, vector<1x96xf32>
    %9 = vector.broadcast %8 : vector<1x96xf32> to vector<16x96xf32>
    %10 = arith.addf %7, %9 : vector<16x96xf32>
    %11 = vector.extract_strided_slice %10 {offsets = [0, 0], sizes = [16, 32], strides = [1, 1]} : vector<16x96xf32> to vector<16x32xf32>
    %12 = vector.extract_strided_slice %10 {offsets = [0, 32], sizes = [16, 32], strides = [1, 1]} : vector<16x96xf32> to vector<16x32xf32>
    %13 = vector.extract_strided_slice %10 {offsets = [0, 64], sizes = [16, 32], strides = [1, 1]} : vector<16x96xf32> to vector<16x32xf32>
    %cst_5 = arith.constant dense<0.000000e+00> : vector<16x16xf32>
    %14 = tpu.matmul %11, %12, %cst_5 {dimension_numbers = #tpu.dot_dimension_numbers<[1], [1], [0], [0], [0, 0, 1, 0], [], []>} : vector<16x32xf32>, vector<16x32xf32>, vector<16x16xf32> -> vector<16x16xf32>
    %c0_6 = arith.constant 0 : index
    %c0_7 = arith.constant 0 : index
    %15 = vector.load %arg3[%c0_6, %c0_7] : memref<16x16xf32, #tpu.memory_space<vmem>>, vector<16x16xf32>
    %16 = arith.addf %14, %15 : vector<16x16xf32>
    %cst_8 = arith.constant dense<0xFF800000> : vector<16xf32>
    %17 = vector.multi_reduction <maximumf>, %16, %cst_8 [1] : vector<16x16xf32> to vector<16xf32>
    %18 = vector.shape_cast %17 : vector<16xf32> to vector<16x1xf32>
    %19 = vector.broadcast %18 : vector<16x1xf32> to vector<16x16xf32>
    %20 = arith.subf %16, %19 : vector<16x16xf32>
    %21 = math.exp %20 : vector<16x16xf32>
    %cst_9 = arith.constant dense<0.000000e+00> : vector<16xf32>
    %22 = vector.multi_reduction <add>, %21, %cst_9 [1] : vector<16x16xf32> to vector<16xf32>
    %23 = vector.shape_cast %22 : vector<16xf32> to vector<16x1xf32>
    %24 = tpu.reciprocal %23 {approx = true} : vector<16x1xf32> -> vector<16x1xf32>
    %25 = vector.broadcast %24 : vector<16x1xf32> to vector<16x16xf32>
    %26 = arith.mulf %21, %25 : vector<16x16xf32>
    %cst_10 = arith.constant dense<0.000000e+00> : vector<16x32xf32>
    %27 = tpu.matmul %26, %13, %cst_10 {dimension_numbers = #tpu.dot_dimension_numbers<[1], [0], [0], [1], [0, 0, 1, 1], [], []>} : vector<16x16xf32>, vector<16x32xf32>, vector<16x32xf32> -> vector<16x32xf32>
    %c0_11 = arith.constant 0 : index
    %c0_12 = arith.constant 0 : index
    %28 = vector.load %arg9[%c0_11, %c0_12] : memref<16x32xf32, #tpu.memory_space<vmem>>, vector<16x32xf32>
    tpu.vector_store %arg9[%c0_11, %c0_12], %27 {strides = array<i32>} : memref<16x32xf32, #tpu.memory_space<vmem>>, vector<16x32xf32>,
    %c0_13 = arith.constant 0 : index
    %c0_14 = arith.constant 0 : index
    %29 = vector.load %arg5[%c0_13, %c0_14] : memref<1x256xf32, #tpu.memory_space<vmem>>, vector<1x256xf32>
    %30 = vector.shape_cast %29 : vector<1x256xf32> to vector<1x256xf32>
    %31 = vector.broadcast %30 : vector<1x256xf32> to vector<2x256xf32>
    %c0_15 = arith.constant 0 : index
    %c0_16 = arith.constant 0 : index
    %32 = vector.load %arg9[%c0_15, %c0_16] : memref<16x32xf32, #tpu.memory_space<vmem>>, vector<2x32xf32>
    %c0_17 = arith.constant 0 : index
    %c0_18 = arith.constant 0 : index
    %33 = vector.load %arg4[%c0_17, %c0_18] : memref<256x256xf32, #tpu.memory_space<vmem>>, vector<32x256xf32>
    %cst_19 = arith.constant dense<0.000000e+00> : vector<2x256xf32>
    %34 = tpu.matmul %32, %33, %cst_19 {dimension_numbers = #tpu.dot_dimension_numbers<[1], [0], [0], [1], [0, 0, 1, 1], [], []>} : vector<2x32xf32>, vector<32x256xf32>, vector<2x256xf32> -> vector<2x256xf32>
    %35 = arith.addf %31, %34 : vector<2x256xf32>
    %c2 = arith.constant 2 : index
    %c0_20 = arith.constant 0 : index
    %36 = vector.load %arg9[%c2, %c0_20] : memref<16x32xf32, #tpu.memory_space<vmem>>, vector<2x32xf32>
    %c32 = arith.constant 32 : index
    %c0_21 = arith.constant 0 : index
    %37 = vector.load %arg4[%c32, %c0_21] : memref<256x256xf32, #tpu.memory_space<vmem>>, vector<32x256xf32>
    %cst_22 = arith.constant dense<0.000000e+00> : vector<2x256xf32>
    %38 = tpu.matmul %36, %37, %cst_22 {dimension_numbers = #tpu.dot_dimension_numbers<[1], [0], [0], [1], [0, 0, 1, 1], [], []>} : vector<2x32xf32>, vector<32x256xf32>, vector<2x256xf32> -> vector<2x256xf32>
    %39 = arith.addf %35, %38 : vector<2x256xf32>
    %c4 = arith.constant 4 : index
    %c0_23 = arith.constant 0 : index
    %40 = vector.load %arg9[%c4, %c0_23] : memref<16x32xf32, #tpu.memory_space<vmem>>, vector<2x32xf32>
    %c64 = arith.constant 64 : index
    %c0_24 = arith.constant 0 : index
    %41 = vector.load %arg4[%c64, %c0_24] : memref<256x256xf32, #tpu.memory_space<vmem>>, vector<32x256xf32>
    %cst_25 = arith.constant dense<0.000000e+00> : vector<2x256xf32>
    %42 = tpu.matmul %40, %41, %cst_25 {dimension_numbers = #tpu.dot_dimension_numbers<[1], [0], [0], [1], [0, 0, 1, 1], [], []>} : vector<2x32xf32>, vector<32x256xf32>, vector<2x256xf32> -> vector<2x256xf32>
    %43 = arith.addf %39, %42 : vector<2x256xf32>
    %c6 = arith.constant 6 : index
    %c0_26 = arith.constant 0 : index
    %44 = vector.load %arg9[%c6, %c0_26] : memref<16x32xf32, #tpu.memory_space<vmem>>, vector<2x32xf32>
    %c96 = arith.constant 96 : index
    %c0_27 = arith.constant 0 : index
    %45 = vector.load %arg4[%c96, %c0_27] : memref<256x256xf32, #tpu.memory_space<vmem>>, vector<32x256xf32>
    %cst_28 = arith.constant dense<0.000000e+00> : vector<2x256xf32>
    %46 = tpu.matmul %44, %45, %cst_28 {dimension_numbers = #tpu.dot_dimension_numbers<[1], [0], [0], [1], [0, 0, 1, 1], [], []>} : vector<2x32xf32>, vector<32x256xf32>, vector<2x256xf32> -> vector<2x256xf32>
    %47 = arith.addf %43, %46 : vector<2x256xf32>
    %c8 = arith.constant 8 : index
    %c0_29 = arith.constant 0 : index
    %48 = vector.load %arg9[%c8, %c0_29] : memref<16x32xf32, #tpu.memory_space<vmem>>, vector<2x32xf32>
    %c128 = arith.constant 128 : index
    %c0_30 = arith.constant 0 : index
    %49 = vector.load %arg4[%c128, %c0_30] : memref<256x256xf32, #tpu.memory_space<vmem>>, vector<32x256xf32>
    %cst_31 = arith.constant dense<0.000000e+00> : vector<2x256xf32>
    %50 = tpu.matmul %48, %49, %cst_31 {dimension_numbers = #tpu.dot_dimension_numbers<[1], [0], [0], [1], [0, 0, 1, 1], [], []>} : vector<2x32xf32>, vector<32x256xf32>, vector<2x256xf32> -> vector<2x256xf32>
    %51 = arith.addf %47, %50 : vector<2x256xf32>
    %c10 = arith.constant 10 : index
    %c0_32 = arith.constant 0 : index
    %52 = vector.load %arg9[%c10, %c0_32] : memref<16x32xf32, #tpu.memory_space<vmem>>, vector<2x32xf32>
    %c160 = arith.constant 160 : index
    %c0_33 = arith.constant 0 : index
    %53 = vector.load %arg4[%c160, %c0_33] : memref<256x256xf32, #tpu.memory_space<vmem>>, vector<32x256xf32>
    %cst_34 = arith.constant dense<0.000000e+00> : vector<2x256xf32>
    %54 = tpu.matmul %52, %53, %cst_34 {dimension_numbers = #tpu.dot_dimension_numbers<[1], [0], [0], [1], [0, 0, 1, 1], [], []>} : vector<2x32xf32>, vector<32x256xf32>, vector<2x256xf32> -> vector<2x256xf32>
    %55 = arith.addf %51, %54 : vector<2x256xf32>
    %c12 = arith.constant 12 : index
    %c0_35 = arith.constant 0 : index
    %56 = vector.load %arg9[%c12, %c0_35] : memref<16x32xf32, #tpu.memory_space<vmem>>, vector<2x32xf32>
    %c192 = arith.constant 192 : index
    %c0_36 = arith.constant 0 : index
    %57 = vector.load %arg4[%c192, %c0_36] : memref<256x256xf32, #tpu.memory_space<vmem>>, vector<32x256xf32>
    %cst_37 = arith.constant dense<0.000000e+00> : vector<2x256xf32>
    %58 = tpu.matmul %56, %57, %cst_37 {dimension_numbers = #tpu.dot_dimension_numbers<[1], [0], [0], [1], [0, 0, 1, 1], [], []>} : vector<2x32xf32>, vector<32x256xf32>, vector<2x256xf32> -> vector<2x256xf32>
    %59 = arith.addf %55, %58 : vector<2x256xf32>
    %c14 = arith.constant 14 : index
    %c0_38 = arith.constant 0 : index
    %60 = vector.load %arg9[%c14, %c0_38] : memref<16x32xf32, #tpu.memory_space<vmem>>, vector<2x32xf32>
    %c224 = arith.constant 224 : index
    %c0_39 = arith.constant 0 : index
    %61 = vector.load %arg4[%c224, %c0_39] : memref<256x256xf32, #tpu.memory_space<vmem>>, vector<32x256xf32>
    %cst_40 = arith.constant dense<0.000000e+00> : vector<2x256xf32>
    %62 = tpu.matmul %60, %61, %cst_40 {dimension_numbers = #tpu.dot_dimension_numbers<[1], [0], [0], [1], [0, 0, 1, 1], [], []>} : vector<2x32xf32>, vector<32x256xf32>, vector<2x256xf32> -> vector<2x256xf32>
    %63 = arith.addf %59, %62 : vector<2x256xf32>
    %c0_41 = arith.constant 0 : index
    %c0_42 = arith.constant 0 : index
    %64 = vector.load %arg6[%c0_41, %c0_42] : memref<256x4xf32, #tpu.memory_space<vmem>>, vector<256x4xf32>
    %cst_43 = arith.constant dense<0.000000e+00> : vector<2x4xf32>
    %65 = tpu.matmul %63, %64, %cst_43 {dimension_numbers = #tpu.dot_dimension_numbers<[1], [0], [0], [1], [0, 0, 1, 1], [], []>} : vector<2x256xf32>, vector<256x4xf32>, vector<2x4xf32> -> vector<2x4xf32>
    %c0_44 = arith.constant 0 : index
    %c0_45 = arith.constant 0 : index
    %66 = vector.load %arg7[%c0_44, %c0_45] : memref<1x4xf32, #tpu.memory_space<vmem>>, vector<1x4xf32>
    %67 = vector.broadcast %66 : vector<1x4xf32> to vector<2x4xf32>
    %68 = arith.addf %65, %67 : vector<2x4xf32>
    %c0_46 = arith.constant 0 : index
    %c0_47 = arith.constant 0 : index
    %69 = vector.load %arg8[%c0_46, %c0_47] : memref<2x4xf32, #tpu.memory_space<vmem>>, vector<2x4xf32>
    tpu.vector_store %arg8[%c0_46, %c0_47], %68 {strides = array<i32>} : memref<2x4xf32, #tpu.memory_space<vmem>>, vector<2x4xf32>,
    return
  }
}

</mosaic_0001>

<llo_original>
// kernel: char_self_att_forward.1
$region0: #{char_self_att_forward.1}
  #allocation0 [shape = 'u32[]', space=smem, size = 0x4, offset = 0x4, fixed_abs, tag = 'smem constant byte address 0x4 - core index']
  #allocation1 [shape = 'u32[72,128]{1,0:T(1,128)}', space=vmem, size = 0x9000, scoped, tag = 'internal scratch']
  #allocation2 [shape = 'f32[16,32]{1,0:T(8,128)}', space=vmem, size = 0x2000, scoped, tag = 'scratch operand']
  %s0 = inlined_call_operand.vmem [shape: s32[16,1], index: 0, kind: input, shape index: {}]
  %s1 = inlined_call_operand.vmem [shape: f32[64,96], index: 1, kind: input, shape index: {}]
  %s2 = inlined_call_operand.vmem [shape: f32[1,96], index: 2, kind: input, shape index: {}]
  %s3 = inlined_call_operand.vmem [shape: f32[16,16], index: 3, kind: input, shape index: {}]
  %s4 = inlined_call_operand.hbm [shape: f32[256,256], index: 4, kind: input, shape index: {}]
  %s5 = inlined_call_operand.vmem [shape: f32[1,256], index: 5, kind: input, shape index: {}]
  %s6 = inlined_call_operand.vmem [shape: f32[256,4], index: 6, kind: input, shape index: {}]
  %s7 = inlined_call_operand.vmem [shape: f32[1,4], index: 7, kind: input, shape index: {}]
  %s8 = inlined_call_operand.hbm [shape: f32[2,4], index: 8, kind: output, shape index: {}]
  %s9 = sld [smem:[#allocation0]]
  $region46: #{char_self_att_forward.1} parent=0
    _
  %s11 = ssub.s32 1, %s9
  %s12 = scalar_select 0, %s11, %s9
  $region1: #{char_self_att_forward.1} parent=0
    #allocation3 [shape = 'u8[262144]{0}', space=vmem, size = 0x40000, scoped, tag = 'input window, operand 4, single buffered']
    #allocation4 [shape = 's32[1]{0}', space=sflag, size = 0x4, scoped, tag = 'scoped memory for char_self_att_forward.1']
    #allocation5 [shape = 's32[1]{0}', space=sflag, size = 0x4, scoped, tag = 'scoped memory for char_self_att_forward.1']
    #allocation6 [shape = 'u8[1024]{0}', space=vmem, size = 0x400, scoped, tag = 'output window, operand 0, single buffered']
    %13 = vsyncpa [#allocation4], 0
    %14 = vsyncpa [#allocation5], 0
    // Predicated region
    $region2: #{char_self_att_forward.1} parent=1 // pred_check
      _
    $region3: #{char_self_att_forward.1} parent=1 // pred_check_branch
      %16 = sbr.rel (0) target = $region5
    $region4: #{char_self_att_forward.1} parent=1 // pred_region
      _
    $region5: #{char_self_att_forward.1} parent=1 // pred_fallthru
      _
    // Predicated region
    $region6: #{char_self_att_forward.1} parent=1 // pred_check
      _
    $region7: #{char_self_att_forward.1} parent=1 // pred_check_branch
      %18 = sbr.rel (0) target = $region9
    $region8: #{char_self_att_forward.1} parent=1 // pred_region
      _
    $region9: #{char_self_att_forward.1} parent=1 // pred_fallthru
      _
    // Predicated region
    $region10: #{char_self_att_forward.1} parent=1 // pred_check
      _
    $region11: #{char_self_att_forward.1} parent=1 // pred_check_branch
      %20 = sbr.rel (0) target = $region13
    $region12: #{char_self_att_forward.1} parent=1 // pred_region
      _
    $region13: #{char_self_att_forward.1} parent=1 // pred_fallthru
      _
    // Predicated region
    $region14: #{char_self_att_forward.1} parent=1 // pred_check
      _
    $region15: #{char_self_att_forward.1} parent=1 // pred_check_branch
      %22 = sbr.rel (0) target = $region17
    $region16: #{char_self_att_forward.1} parent=1 // pred_region
      _
    $region17: #{char_self_att_forward.1} parent=1 // pred_fallthru
      _
    // Predicated region
    $region18: #{char_self_att_forward.1} parent=1 // pred_check
      _
    $region19: #{char_self_att_forward.1} parent=1 // pred_check_branch
      %24 = sbr.rel (0) target = $region21
    $region20: #{char_self_att_forward.1} parent=1 // pred_region
      %26 = vsyncadd [#allocation4], 0
      %s27 = sshll.u32 %s4, 4
      %s28 = int_to_ptr.hbm [resolvable:$true] %s27
      %s29 = sshll.u32 [#allocation3], 4
      %s30 = int_to_ptr.vmem [resolvable:$true] %s29
      %35 = dma.hbm_to_vmem [thread:$0]  %s28, 8192, %s30, [#allocation4], 256, 256, 16
    $region21: #{char_self_att_forward.1} parent=1 // pred_fallthru
      _
    // Predicated region
    $region22: #{char_self_att_forward.1} parent=1 // pred_check
      _
    $region23: #{char_self_att_forward.1} parent=1 // pred_check_branch
      %37 = sbr.rel (0) target = $region25
    $region24: #{char_self_att_forward.1} parent=1 // pred_region
      _
    $region25: #{char_self_att_forward.1} parent=1 // pred_fallthru
      _
    // Predicated region
    $region26: #{char_self_att_forward.1} parent=1 // pred_check
      _
    $region27: #{char_self_att_forward.1} parent=1 // pred_check_branch
      %39 = sbr.rel (0) target = $region29
    $region28: #{char_self_att_forward.1} parent=1 // pred_region
      _
    $region29: #{char_self_att_forward.1} parent=1 // pred_fallthru
      _
    // Predicated region
    $region30: #{char_self_att_forward.1} parent=1 // pred_check
      _
    $region31: #{char_self_att_forward.1} parent=1 // pred_check_branch
      %41 = sbr.rel (0) target = $region33
    $region32: #{char_self_att_forward.1} parent=1 // pred_region
      _
    $region33: #{char_self_att_forward.1} parent=1 // pred_fallthru
      _
    // Predicated region
    $region34: #{char_self_att_forward.1} parent=1 // pred_check
      _
    $region35: #{char_self_att_forward.1} parent=1 // pred_check_branch
      %43 = sbr.rel (0) target = $region37
    $region36: #{char_self_att_forward.1} parent=1 // pred_region
      %45 = dma.done [#allocation4], 8192
    $region37: #{char_self_att_forward.1} parent=1 // pred_fallthru
      _
    %v46 = vld [vmem:[%s0] sm:$0xff]
    %v47 = vld [vmem:[%s0 + $0x8] sm:$0xff]
    %v48 = vlaneseq
    %v49 = vand.u32 %v48, 127
    %50 = vset.pattern.permute.xlu0 0
    %51 = vperm.xlu0 %50, %v46
    %v52 = vpop.permute.xlu0 %51
    %53 = vset.pattern.permute.xlu0 0
    %54 = vperm.xlu0 %53, %v47
    %v55 = vpop.permute.xlu0 %54
    %vm56 = vcmp.eq.s32.totalorder %v49, %v52
    %vm57 = vcmp.eq.s32.totalorder %v49, %v55
    %v58 = vsel %vm56, 1, 0
    %v59 = vsel %vm57, 1, 0
    %v60 = vcvt.s32.f32 %v58
    %v61 = vcvt.s32.f32 %v59
    %v62 = vld [vmem:[%s1] sm:$0xff]
    %v63 = vld [vmem:[%s1 + $0x8] sm:$0xff]
    %v64 = vld [vmem:[%s1 + $0x10] sm:$0xff]
    %v65 = vld [vmem:[%s1 + $0x18] sm:$0xff]
    %v66 = vld [vmem:[%s1 + $0x20] sm:$0xff]
    %v67 = vld [vmem:[%s1 + $0x28] sm:$0xff]
    %v68 = vld [vmem:[%s1 + $0x30] sm:$0xff]
    %v69 = vld [vmem:[%s1 + $0x38] sm:$0xff]
    %v70 = vld [vmem:[%s2] sm:$0x1]
    %v72 = vperm.slane %v70, 0
    %vm74 = vcmask 523264
    %v76 = vsel %vm74, %v60, 0
    %v79 = vsel %vm74, %v61, 0
    %81 = vmatpush.msra.mxu0 0.0
    %82 = vmatpush.msra.mxu0 0.0
    %83 = vmatpush.msra.mxu0 0.0
    %84 = vmatpush.msra.mxu0 0.0
    %85 = vmatpush.msra.mxu0 0.0
    %86 = vmatpush.msra.mxu0 0.0
    %87 = vmatpush.msra.mxu0 0.0
    %88 = vmatpush.msra.mxu0 0.0
    %89 = vmatpush.msra.mxu0 %v69
    %90 = vmatpush.msra.mxu0 %v68
    %91 = vmatpush.msra.mxu0 %v67
    %92 = vmatpush.msra.mxu0 %v66
    %93 = vmatpush.msra.mxu0 %v65
    %94 = vmatpush.msra.mxu0 %v64
    %95 = vmatpush.msra.mxu0 %v63
    %96 = vmatpush.msra.mxu0 %v62
    %97 = vmatmul.f32.gmra.mxu0 %v76
    %v98 = vpop.f32.mrf.mxu0
    %v99 = vadd.f32 %v72, %v98
    %100 = vmatmul.f32.gmra.mxu0 %v79
    %v101 = vpop.f32.mrf.mxu0
    %v102 = vadd.f32 %v72, %v101
    %103 = vdwg.mxu0
    %v104 = vld [vmem:[%s3] sm:$0xff]
    %v105 = vld [vmem:[%s3 + $0x8] sm:$0xff]
    %108 = vrot.lane.b32.xlu0 %v99, 96
    %v109 = vpop.permute.xlu0 %108
    %110 = vrot.lane.b32.xlu0 %v102, 96
    %v111 = vpop.permute.xlu0 %110
    %vm112 = vcmask 261120
    %v113 = vsel %vm112, %v99, 0
    %v115 = vsel %vm112, %v102, 0
    %v117 = vsel %vm112, %v109, 0
    %v119 = vsel %vm112, %v111, 0
    %121 = vmatpush.xpose.msra.mxu0 0.0
    %122 = vmatpush.xpose.msra.mxu0 0.0
    %123 = vmatpush.xpose.msra.mxu0 0.0
    %124 = vmatpush.xpose.msra.mxu0 0.0
    %125 = vmatpush.xpose.msra.mxu0 0.0
    %126 = vmatpush.xpose.msra.mxu0 0.0
    %127 = vmatpush.xpose.msra.mxu0 0.0
    %128 = vmatpush.xpose.msra.mxu0 0.0
    %129 = vmatpush.xpose.msra.mxu0 0.0
    %130 = vmatpush.xpose.msra.mxu0 0.0
    %131 = vmatpush.xpose.msra.mxu0 0.0
    %132 = vmatpush.xpose.msra.mxu0 0.0
    %133 = vmatpush.xpose.msra.mxu0 0.0
    %134 = vmatpush.xpose.msra.mxu0 0.0
    %135 = vmatpush.xpose.msra.mxu0 %v119
    %136 = vmatpush.xpose.msra.mxu0 %v117
    %137 = vmatmul.f32.gmra.mxu0 %v113
    %v138 = vpop.f32.mrf.mxu0
    %v139 = vadd.f32 %v104, %v138
    %140 = vmatmul.f32.gmra.mxu0 %v115
    %v141 = vpop.f32.mrf.mxu0
    %v142 = vadd.f32 %v105, %v141
    %143 = vdwg.mxu0
    %vm144 = vcmask 130048
    %v145 = vsel %vm144, %v139, -inf
    %146 = vmax.xlane.f32.xlu0 %v145
    %v147 = vpop.xlane.xlu0 %146
    %v148 = vsel %vm144, %v142, -inf
    %149 = vmax.xlane.f32.xlu0 %v148
    %v150 = vpop.xlane.xlu0 %149
    %v151 = vsub.f32 %v139, %v147
    %v152 = vsub.f32 %v142, %v150
    %v153 = vmul.f32 %v151, 1.442695
    %v154 = vpow.pop %v153
    %v155 = vmul.f32 %v152, 1.442695
    %v156 = vpow.pop %v155
    %v157 = vsel %vm144, %v154, 0.0
    %158 = vadd.xlane.f32.xlu0 %v157
    %v159 = vpop.xlane.xlu0 %158
    %v160 = vsel %vm144, %v156, 0.0
    %161 = vadd.xlane.f32.xlu0 %v160
    %v162 = vpop.xlane.xlu0 %161
    %v163 = vrcp.pop %v159
    %v164 = vrcp.pop %v162
    %v165 = vmul.f32 %v154, %v163
    %v166 = vmul.f32 %v156, %v164
    %167 = vrot.lane.b32.xlu0 %v99, 64
    %v168 = vpop.permute.xlu0 %167
    %169 = vrot.lane.b32.xlu0 %v102, 64
    %v170 = vpop.permute.xlu0 %169
    %v174 = vsel %vm144, %v165, 0
    %v177 = vsel %vm144, %v166, 0
    %179 = vmatpush.msra.mxu0 0.0
    %180 = vmatpush.msra.mxu0 0.0
    %181 = vmatpush.msra.mxu0 0.0
    %182 = vmatpush.msra.mxu0 0.0
    %183 = vmatpush.msra.mxu0 0.0
    %184 = vmatpush.msra.mxu0 0.0
    %185 = vmatpush.msra.mxu0 0.0
    %186 = vmatpush.msra.mxu0 0.0
    %187 = vmatpush.msra.mxu0 0.0
    %188 = vmatpush.msra.mxu0 0.0
    %189 = vmatpush.msra.mxu0 0.0
    %190 = vmatpush.msra.mxu0 0.0
    %191 = vmatpush.msra.mxu0 0.0
    %192 = vmatpush.msra.mxu0 0.0
    %193 = vmatpush.msra.mxu0 %v170
    %194 = vmatpush.msra.mxu0 %v168
    %195 = vmatmul.f32.gmra.mxu0 %v174
    %v196 = vpop.f32.mrf.mxu0
    %v197 = vadd.f32 0.0, %v196
    %198 = vmatmul.f32.gmra.mxu0 %v177
    %v199 = vpop.f32.mrf.mxu0
    %v200 = vadd.f32 0.0, %v199
    %201 = vdwg.mxu0
    %202 = vst.msk [vmem:[#allocation2] sm:$0xff] %vm112, %v197
    %203 = vst.msk [vmem:[#allocation2 + $0x8] sm:$0xff] %vm112, %v200
    %v204 = vld [vmem:[%s5] sm:$0x3]
    %v206 = vperm.slane %v204, 0
    %v207 = vperm.slane %v204, 1
    %v210 = vld [vmem:[#allocation2] sm:$0x3]
    %v211 = vld [vmem:[#allocation3] sm:$0xff]
    %v212 = vld [vmem:[#allocation3 + $0x8] sm:$0xff]
    %v213 = vld [vmem:[#allocation3 + $0x10] sm:$0xff]
    %v214 = vld [vmem:[#allocation3 + $0x18] sm:$0xff]
    %v215 = vld [vmem:[#allocation3 + $0x20] sm:$0xff]
    %v216 = vld [vmem:[#allocation3 + $0x28] sm:$0xff]
    %v217 = vld [vmem:[#allocation3 + $0x30] sm:$0xff]
    %v218 = vld [vmem:[#allocation3 + $0x38] sm:$0xff]
    %v220 = vsel %vm112, %v210, 0
    %222 = vmatpush.msra.mxu0 0.0
    %223 = vmatpush.msra.mxu0 0.0
    %224 = vmatpush.msra.mxu0 0.0
    %225 = vmatpush.msra.mxu0 0.0
    %226 = vmatpush.msra.mxu0 0.0
    %227 = vmatpush.msra.mxu0 0.0
    %228 = vmatpush.msra.mxu0 0.0
    %229 = vmatpush.msra.mxu0 0.0
    %230 = vmatpush.msra.mxu0 0.0
    %231 = vmatpush.msra.mxu0 0.0
    %232 = vmatpush.msra.mxu0 0.0
    %233 = vmatpush.msra.mxu0 0.0
    %234 = vmatpush.msra.mxu0 %v217
    %235 = vmatpush.msra.mxu0 %v215
    %236 = vmatpush.msra.mxu0 %v213
    %237 = vmatpush.msra.mxu0 %v211
    %238 = vmatmul.f32.gmra.mxu0 %v220
    %v239 = vpop.f32.mrf.mxu0
    %v240 = vadd.f32 0.0, %v239
    %241 = vdwg.mxu0
    %242 = vmatpush.msra.mxu0 0.0
    %243 = vmatpush.msra.mxu0 0.0
    %244 = vmatpush.msra.mxu0 0.0
    %245 = vmatpush.msra.mxu0 0.0
    %246 = vmatpush.msra.mxu0 0.0
    %247 = vmatpush.msra.mxu0 0.0
    %248 = vmatpush.msra.mxu0 0.0
    %249 = vmatpush.msra.mxu0 0.0
    %250 = vmatpush.msra.mxu0 0.0
    %251 = vmatpush.msra.mxu0 0.0
    %252 = vmatpush.msra.mxu0 0.0
    %253 = vmatpush.msra.mxu0 0.0
    %254 = vmatpush.msra.mxu0 %v218
    %255 = vmatpush.msra.mxu0 %v216
    %256 = vmatpush.msra.mxu0 %v214
    %257 = vmatpush.msra.mxu0 %v212
    %258 = vmatmul.f32.gmra.mxu0 %v220
    %v259 = vpop.f32.mrf.mxu0
    %v260 = vadd.f32 0.0, %v259
    %261 = vdwg.mxu0
    %v262 = vadd.f32 %v206, %v240
    %v263 = vadd.f32 %v207, %v260
    %v264 = vld [vmem:[#allocation2 + $0x2] sm:$0x3]
    %v265 = vld [vmem:[#allocation3 + $0x40] sm:$0xff]
    %v266 = vld [vmem:[#allocation3 + $0x48] sm:$0xff]
    %v267 = vld [vmem:[#allocation3 + $0x50] sm:$0xff]
    %v268 = vld [vmem:[#allocation3 + $0x58] sm:$0xff]
    %v269 = vld [vmem:[#allocation3 + $0x60] sm:$0xff]
    %v270 = vld [vmem:[#allocation3 + $0x68] sm:$0xff]
    %v271 = vld [vmem:[#allocation3 + $0x70] sm:$0xff]
    %v272 = vld [vmem:[#allocation3 + $0x78] sm:$0xff]
    %v274 = vsel %vm112, %v264, 0
    %276 = vmatpush.msra.mxu0 0.0
    %277 = vmatpush.msra.mxu0 0.0
    %278 = vmatpush.msra.mxu0 0.0
    %279 = vmatpush.msra.mxu0 0.0
    %280 = vmatpush.msra.mxu0 0.0
    %281 = vmatpush.msra.mxu0 0.0
    %282 = vmatpush.msra.mxu0 0.0
    %283 = vmatpush.msra.mxu0 0.0
    %284 = vmatpush.msra.mxu0 0.0
    %285 = vmatpush.msra.mxu0 0.0
    %286 = vmatpush.msra.mxu0 0.0
    %287 = vmatpush.msra.mxu0 0.0
    %288 = vmatpush.msra.mxu0 %v271
    %289 = vmatpush.msra.mxu0 %v269
    %290 = vmatpush.msra.mxu0 %v267
    %291 = vmatpush.msra.mxu0 %v265
    %292 = vmatmul.f32.gmra.mxu0 %v274
    %v293 = vpop.f32.mrf.mxu0
    %v294 = vadd.f32 0.0, %v293
    %295 = vdwg.mxu0
    %296 = vmatpush.msra.mxu0 0.0
    %297 = vmatpush.msra.mxu0 0.0
    %298 = vmatpush.msra.mxu0 0.0
    %299 = vmatpush.msra.mxu0 0.0
    %300 = vmatpush.msra.mxu0 0.0
    %301 = vmatpush.msra.mxu0 0.0
    %302 = vmatpush.msra.mxu0 0.0
    %303 = vmatpush.msra.mxu0 0.0
    %304 = vmatpush.msra.mxu0 0.0
    %305 = vmatpush.msra.mxu0 0.0
    %306 = vmatpush.msra.mxu0 0.0
    %307 = vmatpush.msra.mxu0 0.0
    %308 = vmatpush.msra.mxu0 %v272
    %309 = vmatpush.msra.mxu0 %v270
    %310 = vmatpush.msra.mxu0 %v268
    %311 = vmatpush.msra.mxu0 %v266
    %312 = vmatmul.f32.gmra.mxu0 %v274
    %v313 = vpop.f32.mrf.mxu0
    %v314 = vadd.f32 0.0, %v313
    %315 = vdwg.mxu0
    %v316 = vadd.f32 %v262, %v294
    %v317 = vadd.f32 %v263, %v314
    %v318 = vld [vmem:[#allocation2 + $0x4] sm:$0x3]
    %v319 = vld [vmem:[#allocation3 + $0x80] sm:$0xff]
    %v320 = vld [vmem:[#allocation3 + $0x88] sm:$0xff]
    %v321 = vld [vmem:[#allocation3 + $0x90] sm:$0xff]
    %v322 = vld [vmem:[#allocation3 + $0x98] sm:$0xff]
    %v323 = vld [vmem:[#allocation3 + $0xa0] sm:$0xff]
    %v324 = vld [vmem:[#allocation3 + $0xa8] sm:$0xff]
    %v325 = vld [vmem:[#allocation3 + $0xb0] sm:$0xff]
    %v326 = vld [vmem:[#allocation3 + $0xb8] sm:$0xff]
    %v328 = vsel %vm112, %v318, 0
    %330 = vmatpush.msra.mxu0 0.0
    %331 = vmatpush.msra.mxu0 0.0
    %332 = vmatpush.msra.mxu0 0.0
    %333 = vmatpush.msra.mxu0 0.0
    %334 = vmatpush.msra.mxu0 0.0
    %335 = vmatpush.msra.mxu0 0.0
    %336 = vmatpush.msra.mxu0 0.0
    %337 = vmatpush.msra.mxu0 0.0
    %338 = vmatpush.msra.mxu0 0.0
    %339 = vmatpush.msra.mxu0 0.0
    %340 = vmatpush.msra.mxu0 0.0
    %341 = vmatpush.msra.mxu0 0.0
    %342 = vmatpush.msra.mxu0 %v325
    %343 = vmatpush.msra.mxu0 %v323
    %344 = vmatpush.msra.mxu0 %v321
    %345 = vmatpush.msra.mxu0 %v319
    %346 = vmatmul.f32.gmra.mxu0 %v328
    %v347 = vpop.f32.mrf.mxu0
    %v348 = vadd.f32 0.0, %v347
    %349 = vdwg.mxu0
    %350 = vmatpush.msra.mxu0 0.0
    %351 = vmatpush.msra.mxu0 0.0
    %352 = vmatpush.msra.mxu0 0.0
    %353 = vmatpush.msra.mxu0 0.0
    %354 = vmatpush.msra.mxu0 0.0
    %355 = vmatpush.msra.mxu0 0.0
    %356 = vmatpush.msra.mxu0 0.0
    %357 = vmatpush.msra.mxu0 0.0
    %358 = vmatpush.msra.mxu0 0.0
    %359 = vmatpush.msra.mxu0 0.0
    %360 = vmatpush.msra.mxu0 0.0
    %361 = vmatpush.msra.mxu0 0.0
    %362 = vmatpush.msra.mxu0 %v326
    %363 = vmatpush.msra.mxu0 %v324
    %364 = vmatpush.msra.mxu0 %v322
    %365 = vmatpush.msra.mxu0 %v320
    %366 = vmatmul.f32.gmra.mxu0 %v328
    %v367 = vpop.f32.mrf.mxu0
    %v368 = vadd.f32 0.0, %v367
    %369 = vdwg.mxu0
    %v370 = vadd.f32 %v316, %v348
    %v371 = vadd.f32 %v317, %v368
    %v372 = vld [vmem:[#allocation2 + $0x6] sm:$0x3]
    %v373 = vld [vmem:[#allocation3 + $0xc0] sm:$0xff]
    %v374 = vld [vmem:[#allocation3 + $0xc8] sm:$0xff]
    %v375 = vld [vmem:[#allocation3 + $0xd0] sm:$0xff]
    %v376 = vld [vmem:[#allocation3 + $0xd8] sm:$0xff]
    %v377 = vld [vmem:[#allocation3 + $0xe0] sm:$0xff]
    %v378 = vld [vmem:[#allocation3 + $0xe8] sm:$0xff]
    %v379 = vld [vmem:[#allocation3 + $0xf0] sm:$0xff]
    %v380 = vld [vmem:[#allocation3 + $0xf8] sm:$0xff]
    %v382 = vsel %vm112, %v372, 0
    %384 = vmatpush.msra.mxu0 0.0
    %385 = vmatpush.msra.mxu0 0.0
    %386 = vmatpush.msra.mxu0 0.0
    %387 = vmatpush.msra.mxu0 0.0
    %388 = vmatpush.msra.mxu0 0.0
    %389 = vmatpush.msra.mxu0 0.0
    %390 = vmatpush.msra.mxu0 0.0
    %391 = vmatpush.msra.mxu0 0.0
    %392 = vmatpush.msra.mxu0 0.0
    %393 = vmatpush.msra.mxu0 0.0
    %394 = vmatpush.msra.mxu0 0.0
    %395 = vmatpush.msra.mxu0 0.0
    %396 = vmatpush.msra.mxu0 %v379
    %397 = vmatpush.msra.mxu0 %v377
    %398 = vmatpush.msra.mxu0 %v375
    %399 = vmatpush.msra.mxu0 %v373
    %400 = vmatmul.f32.gmra.mxu0 %v382
    %v401 = vpop.f32.mrf.mxu0
    %v402 = vadd.f32 0.0, %v401
    %403 = vdwg.mxu0
    %404 = vmatpush.msra.mxu0 0.0
    %405 = vmatpush.msra.mxu0 0.0
    %406 = vmatpush.msra.mxu0 0.0
    %407 = vmatpush.msra.mxu0 0.0
    %408 = vmatpush.msra.mxu0 0.0
    %409 = vmatpush.msra.mxu0 0.0
    %410 = vmatpush.msra.mxu0 0.0
    %411 = vmatpush.msra.mxu0 0.0
    %412 = vmatpush.msra.mxu0 0.0
    %413 = vmatpush.msra.mxu0 0.0
    %414 = vmatpush.msra.mxu0 0.0
    %415 = vmatpush.msra.mxu0 0.0
    %416 = vmatpush.msra.mxu0 %v380
    %417 = vmatpush.msra.mxu0 %v378
    %418 = vmatpush.msra.mxu0 %v376
    %419 = vmatpush.msra.mxu0 %v374
    %420 = vmatmul.f32.gmra.mxu0 %v382
    %v421 = vpop.f32.mrf.mxu0
    %v422 = vadd.f32 0.0, %v421
    %423 = vdwg.mxu0
    %v424 = vadd.f32 %v370, %v402
    %v425 = vadd.f32 %v371, %v422
    %v426 = vld [vmem:[#allocation2 + $0x8] sm:$0x3]
    %v427 = vld [vmem:[#allocation3 + $0x100] sm:$0xff]
    %v428 = vld [vmem:[#allocation3 + $0x108] sm:$0xff]
    %v429 = vld [vmem:[#allocation3 + $0x110] sm:$0xff]
    %v430 = vld [vmem:[#allocation3 + $0x118] sm:$0xff]
    %v431 = vld [vmem:[#allocation3 + $0x120] sm:$0xff]
    %v432 = vld [vmem:[#allocation3 + $0x128] sm:$0xff]
    %v433 = vld [vmem:[#allocation3 + $0x130] sm:$0xff]
    %v434 = vld [vmem:[#allocation3 + $0x138] sm:$0xff]
    %v436 = vsel %vm112, %v426, 0
    %438 = vmatpush.msra.mxu0 0.0
    %439 = vmatpush.msra.mxu0 0.0
    %440 = vmatpush.msra.mxu0 0.0
    %441 = vmatpush.msra.mxu0 0.0
    %442 = vmatpush.msra.mxu0 0.0
    %443 = vmatpush.msra.mxu0 0.0
    %444 = vmatpush.msra.mxu0 0.0
    %445 = vmatpush.msra.mxu0 0.0
    %446 = vmatpush.msra.mxu0 0.0
    %447 = vmatpush.msra.mxu0 0.0
    %448 = vmatpush.msra.mxu0 0.0
    %449 = vmatpush.msra.mxu0 0.0
    %450 = vmatpush.msra.mxu0 %v433
    %451 = vmatpush.msra.mxu0 %v431
    %452 = vmatpush.msra.mxu0 %v429
    %453 = vmatpush.msra.mxu0 %v427
    %454 = vmatmul.f32.gmra.mxu0 %v436
    %v455 = vpop.f32.mrf.mxu0
    %v456 = vadd.f32 0.0, %v455
    %457 = vdwg.mxu0
    %458 = vmatpush.msra.mxu0 0.0
    %459 = vmatpush.msra.mxu0 0.0
    %460 = vmatpush.msra.mxu0 0.0
    %461 = vmatpush.msra.mxu0 0.0
    %462 = vmatpush.msra.mxu0 0.0
    %463 = vmatpush.msra.mxu0 0.0
    %464 = vmatpush.msra.mxu0 0.0
    %465 = vmatpush.msra.mxu0 0.0
    %466 = vmatpush.msra.mxu0 0.0
    %467 = vmatpush.msra.mxu0 0.0
    %468 = vmatpush.msra.mxu0 0.0
    %469 = vmatpush.msra.mxu0 0.0
    %470 = vmatpush.msra.mxu0 %v434
    %471 = vmatpush.msra.mxu0 %v432
    %472 = vmatpush.msra.mxu0 %v430
    %473 = vmatpush.msra.mxu0 %v428
    %474 = vmatmul.f32.gmra.mxu0 %v436
    %v475 = vpop.f32.mrf.mxu0
    %v476 = vadd.f32 0.0, %v475
    %477 = vdwg.mxu0
    %v478 = vadd.f32 %v424, %v456
    %v479 = vadd.f32 %v425, %v476
    %v480 = vld [vmem:[#allocation2 + $0xa] sm:$0x3]
    %v481 = vld [vmem:[#allocation3 + $0x140] sm:$0xff]
    %v482 = vld [vmem:[#allocation3 + $0x148] sm:$0xff]
    %v483 = vld [vmem:[#allocation3 + $0x150] sm:$0xff]
    %v484 = vld [vmem:[#allocation3 + $0x158] sm:$0xff]
    %v485 = vld [vmem:[#allocation3 + $0x160] sm:$0xff]
    %v486 = vld [vmem:[#allocation3 + $0x168] sm:$0xff]
    %v487 = vld [vmem:[#allocation3 + $0x170] sm:$0xff]
    %v488 = vld [vmem:[#allocation3 + $0x178] sm:$0xff]
    %v490 = vsel %vm112, %v480, 0
    %492 = vmatpush.msra.mxu0 0.0
    %493 = vmatpush.msra.mxu0 0.0
    %494 = vmatpush.msra.mxu0 0.0
    %495 = vmatpush.msra.mxu0 0.0
    %496 = vmatpush.msra.mxu0 0.0
    %497 = vmatpush.msra.mxu0 0.0
    %498 = vmatpush.msra.mxu0 0.0
    %499 = vmatpush.msra.mxu0 0.0
    %500 = vmatpush.msra.mxu0 0.0
    %501 = vmatpush.msra.mxu0 0.0
    %502 = vmatpush.msra.mxu0 0.0
    %503 = vmatpush.msra.mxu0 0.0
    %504 = vmatpush.msra.mxu0 %v487
    %505 = vmatpush.msra.mxu0 %v485
    %506 = vmatpush.msra.mxu0 %v483
    %507 = vmatpush.msra.mxu0 %v481
    %508 = vmatmul.f32.gmra.mxu0 %v490
    %v509 = vpop.f32.mrf.mxu0
    %v510 = vadd.f32 0.0, %v509
    %511 = vdwg.mxu0
    %512 = vmatpush.msra.mxu0 0.0
    %513 = vmatpush.msra.mxu0 0.0
    %514 = vmatpush.msra.mxu0 0.0
    %515 = vmatpush.msra.mxu0 0.0
    %516 = vmatpush.msra.mxu0 0.0
    %517 = vmatpush.msra.mxu0 0.0
    %518 = vmatpush.msra.mxu0 0.0
    %519 = vmatpush.msra.mxu0 0.0
    %520 = vmatpush.msra.mxu0 0.0
    %521 = vmatpush.msra.mxu0 0.0
    %522 = vmatpush.msra.mxu0 0.0
    %523 = vmatpush.msra.mxu0 0.0
    %524 = vmatpush.msra.mxu0 %v488
    %525 = vmatpush.msra.mxu0 %v486
    %526 = vmatpush.msra.mxu0 %v484
    %527 = vmatpush.msra.mxu0 %v482
    %528 = vmatmul.f32.gmra.mxu0 %v490
    %v529 = vpop.f32.mrf.mxu0
    %v530 = vadd.f32 0.0, %v529
    %531 = vdwg.mxu0
    %v532 = vadd.f32 %v478, %v510
    %v533 = vadd.f32 %v479, %v530
    %v534 = vld [vmem:[#allocation2 + $0xc] sm:$0x3]
    %v535 = vld [vmem:[#allocation3 + $0x180] sm:$0xff]
    %v536 = vld [vmem:[#allocation3 + $0x188] sm:$0xff]
    %v537 = vld [vmem:[#allocation3 + $0x190] sm:$0xff]
    %v538 = vld [vmem:[#allocation3 + $0x198] sm:$0xff]
    %v539 = vld [vmem:[#allocation3 + $0x1a0] sm:$0xff]
    %v540 = vld [vmem:[#allocation3 + $0x1a8] sm:$0xff]
    %v541 = vld [vmem:[#allocation3 + $0x1b0] sm:$0xff]
    %v542 = vld [vmem:[#allocation3 + $0x1b8] sm:$0xff]
    %v544 = vsel %vm112, %v534, 0
    %546 = vmatpush.msra.mxu0 0.0
    %547 = vmatpush.msra.mxu0 0.0
    %548 = vmatpush.msra.mxu0 0.0
    %549 = vmatpush.msra.mxu0 0.0
    %550 = vmatpush.msra.mxu0 0.0
    %551 = vmatpush.msra.mxu0 0.0
    %552 = vmatpush.msra.mxu0 0.0
    %553 = vmatpush.msra.mxu0 0.0
    %554 = vmatpush.msra.mxu0 0.0
    %555 = vmatpush.msra.mxu0 0.0
    %556 = vmatpush.msra.mxu0 0.0
    %557 = vmatpush.msra.mxu0 0.0
    %558 = vmatpush.msra.mxu0 %v541
    %559 = vmatpush.msra.mxu0 %v539
    %560 = vmatpush.msra.mxu0 %v537
    %561 = vmatpush.msra.mxu0 %v535
    %562 = vmatmul.f32.gmra.mxu0 %v544
    %v563 = vpop.f32.mrf.mxu0
    %v564 = vadd.f32 0.0, %v563
    %565 = vdwg.mxu0
    %566 = vmatpush.msra.mxu0 0.0
    %567 = vmatpush.msra.mxu0 0.0
    %568 = vmatpush.msra.mxu0 0.0
    %569 = vmatpush.msra.mxu0 0.0
    %570 = vmatpush.msra.mxu0 0.0
    %571 = vmatpush.msra.mxu0 0.0
    %572 = vmatpush.msra.mxu0 0.0
    %573 = vmatpush.msra.mxu0 0.0
    %574 = vmatpush.msra.mxu0 0.0
    %575 = vmatpush.msra.mxu0 0.0
    %576 = vmatpush.msra.mxu0 0.0
    %577 = vmatpush.msra.mxu0 0.0
    %578 = vmatpush.msra.mxu0 %v542
    %579 = vmatpush.msra.mxu0 %v540
    %580 = vmatpush.msra.mxu0 %v538
    %581 = vmatpush.msra.mxu0 %v536
    %582 = vmatmul.f32.gmra.mxu0 %v544
    %v583 = vpop.f32.mrf.mxu0
    %v584 = vadd.f32 0.0, %v583
    %585 = vdwg.mxu0
    %v586 = vadd.f32 %v532, %v564
    %v587 = vadd.f32 %v533, %v584
    %v588 = vld [vmem:[#allocation2 + $0xe] sm:$0x3]
    %v589 = vld [vmem:[#allocation3 + $0x1c0] sm:$0xff]
    %v590 = vld [vmem:[#allocation3 + $0x1c8] sm:$0xff]
    %v591 = vld [vmem:[#allocation3 + $0x1d0] sm:$0xff]
    %v592 = vld [vmem:[#allocation3 + $0x1d8] sm:$0xff]
    %v593 = vld [vmem:[#allocation3 + $0x1e0] sm:$0xff]
    %v594 = vld [vmem:[#allocation3 + $0x1e8] sm:$0xff]
    %v595 = vld [vmem:[#allocation3 + $0x1f0] sm:$0xff]
    %v596 = vld [vmem:[#allocation3 + $0x1f8] sm:$0xff]
    %v598 = vsel %vm112, %v588, 0
    %600 = vmatpush.msra.mxu0 0.0
    %601 = vmatpush.msra.mxu0 0.0
    %602 = vmatpush.msra.mxu0 0.0
    %603 = vmatpush.msra.mxu0 0.0
    %604 = vmatpush.msra.mxu0 0.0
    %605 = vmatpush.msra.mxu0 0.0
    %606 = vmatpush.msra.mxu0 0.0
    %607 = vmatpush.msra.mxu0 0.0
    %608 = vmatpush.msra.mxu0 0.0
    %609 = vmatpush.msra.mxu0 0.0
    %610 = vmatpush.msra.mxu0 0.0
    %611 = vmatpush.msra.mxu0 0.0
    %612 = vmatpush.msra.mxu0 %v595
    %613 = vmatpush.msra.mxu0 %v593
    %614 = vmatpush.msra.mxu0 %v591
    %615 = vmatpush.msra.mxu0 %v589
    %616 = vmatmul.f32.gmra.mxu0 %v598
    %v617 = vpop.f32.mrf.mxu0
    %v618 = vadd.f32 0.0, %v617
    %619 = vdwg.mxu0
    %620 = vmatpush.msra.mxu0 0.0
    %621 = vmatpush.msra.mxu0 0.0
    %622 = vmatpush.msra.mxu0 0.0
    %623 = vmatpush.msra.mxu0 0.0
    %624 = vmatpush.msra.mxu0 0.0
    %625 = vmatpush.msra.mxu0 0.0
    %626 = vmatpush.msra.mxu0 0.0
    %627 = vmatpush.msra.mxu0 0.0
    %628 = vmatpush.msra.mxu0 0.0
    %629 = vmatpush.msra.mxu0 0.0
    %630 = vmatpush.msra.mxu0 0.0
    %631 = vmatpush.msra.mxu0 0.0
    %632 = vmatpush.msra.mxu0 %v596
    %633 = vmatpush.msra.mxu0 %v594
    %634 = vmatpush.msra.mxu0 %v592
    %635 = vmatpush.msra.mxu0 %v590
    %636 = vmatmul.f32.gmra.mxu0 %v598
    %v637 = vpop.f32.mrf.mxu0
    %v638 = vadd.f32 0.0, %v637
    %639 = vdwg.mxu0
    %v640 = vadd.f32 %v586, %v618
    %v641 = vadd.f32 %v587, %v638
    %v642 = vld [vmem:[%s6] sm:$0xff]
    %v643 = vld [vmem:[%s6 + $0x8] sm:$0xff]
    %v644 = vld [vmem:[%s6 + $0x10] sm:$0xff]
    %v645 = vld [vmem:[%s6 + $0x18] sm:$0xff]
    %v646 = vld [vmem:[%s6 + $0x20] sm:$0xff]
    %v647 = vld [vmem:[%s6 + $0x28] sm:$0xff]
    %v648 = vld [vmem:[%s6 + $0x30] sm:$0xff]
    %v649 = vld [vmem:[%s6 + $0x38] sm:$0xff]
    %v650 = vld [vmem:[%s6 + $0x40] sm:$0xff]
    %v651 = vld [vmem:[%s6 + $0x48] sm:$0xff]
    %v652 = vld [vmem:[%s6 + $0x50] sm:$0xff]
    %v653 = vld [vmem:[%s6 + $0x58] sm:$0xff]
    %v654 = vld [vmem:[%s6 + $0x60] sm:$0xff]
    %v655 = vld [vmem:[%s6 + $0x68] sm:$0xff]
    %v656 = vld [vmem:[%s6 + $0x70] sm:$0xff]
    %v657 = vld [vmem:[%s6 + $0x78] sm:$0xff]
    %v658 = vld [vmem:[%s6 + $0x80] sm:$0xff]
    %v659 = vld [vmem:[%s6 + $0x88] sm:$0xff]
    %v660 = vld [vmem:[%s6 + $0x90] sm:$0xff]
    %v661 = vld [vmem:[%s6 + $0x98] sm:$0xff]
    %v662 = vld [vmem:[%s6 + $0xa0] sm:$0xff]
    %v663 = vld [vmem:[%s6 + $0xa8] sm:$0xff]
    %v664 = vld [vmem:[%s6 + $0xb0] sm:$0xff]
    %v665 = vld [vmem:[%s6 + $0xb8] sm:$0xff]
    %v666 = vld [vmem:[%s6 + $0xc0] sm:$0xff]
    %v667 = vld [vmem:[%s6 + $0xc8] sm:$0xff]
    %v668 = vld [vmem:[%s6 + $0xd0] sm:$0xff]
    %v669 = vld [vmem:[%s6 + $0xd8] sm:$0xff]
    %v670 = vld [vmem:[%s6 + $0xe0] sm:$0xff]
    %v671 = vld [vmem:[%s6 + $0xe8] sm:$0xff]
    %v672 = vld [vmem:[%s6 + $0xf0] sm:$0xff]
    %v673 = vld [vmem:[%s6 + $0xf8] sm:$0xff]
    %v674 = vld [vmem:[%s7] sm:$0x1]
    %v676 = vperm.slane %v674, 0
    %678 = vmatpush.msra.mxu0 %v657
    %679 = vmatpush.msra.mxu0 %v656
    %680 = vmatpush.msra.mxu0 %v655
    %681 = vmatpush.msra.mxu0 %v654
    %682 = vmatpush.msra.mxu0 %v653
    %683 = vmatpush.msra.mxu0 %v652
    %684 = vmatpush.msra.mxu0 %v651
    %685 = vmatpush.msra.mxu0 %v650
    %686 = vmatpush.msra.mxu0 %v649
    %687 = vmatpush.msra.mxu0 %v648
    %688 = vmatpush.msra.mxu0 %v647
    %689 = vmatpush.msra.mxu0 %v646
    %690 = vmatpush.msra.mxu0 %v645
    %691 = vmatpush.msra.mxu0 %v644
    %692 = vmatpush.msra.mxu0 %v643
    %693 = vmatpush.msra.mxu0 %v642
    %694 = vmatmul.f32.gmra.mxu0 %v640
    %v695 = vpop.f32.mrf.mxu0
    %v696 = vadd.f32 %v676, %v695
    %697 = vdwg.mxu0
    %698 = vmatpush.msra.mxu0 %v673
    %699 = vmatpush.msra.mxu0 %v672
    %700 = vmatpush.msra.mxu0 %v671
    %701 = vmatpush.msra.mxu0 %v670
    %702 = vmatpush.msra.mxu0 %v669
    %703 = vmatpush.msra.mxu0 %v668
    %704 = vmatpush.msra.mxu0 %v667
    %705 = vmatpush.msra.mxu0 %v666
    %706 = vmatpush.msra.mxu0 %v665
    %707 = vmatpush.msra.mxu0 %v664
    %708 = vmatpush.msra.mxu0 %v663
    %709 = vmatpush.msra.mxu0 %v662
    %710 = vmatpush.msra.mxu0 %v661
    %711 = vmatpush.msra.mxu0 %v660
    %712 = vmatpush.msra.mxu0 %v659
    %713 = vmatpush.msra.mxu0 %v658
    %714 = vmatmul.f32.gmra.mxu0 %v641
    %v715 = vpop.f32.mrf.mxu0
    %v716 = vadd.f32 %v696, %v715
    %717 = vdwg.mxu0
    %vm718 = vcmask 25600
    %719 = vst.msk [vmem:[#allocation6] sm:$0x3] %vm718, %v716
    // Predicated region
    $region38: #{char_self_att_forward.1} parent=1 // pred_check
      _
    $region39: #{char_self_att_forward.1} parent=1 // pred_check_branch
      %721 = sbr.rel (0) target = $region41
    $region40: #{char_self_att_forward.1} parent=1 // pred_region
      %723 = vsyncadd [#allocation5], 0
      %s725 = sshll.u32 [#allocation6], 4
      %s726 = int_to_ptr.vmem [resolvable:$true] %s725
      %s727 = sshll.u32 %s8, 4
      %s728 = int_to_ptr.hbm [resolvable:$true] %s727
      %730 = dma.vmem_to_hbm [thread:$0]  %s726, 32, %s728, [#allocation5]
    $region41: #{char_self_att_forward.1} parent=1 // pred_fallthru
      _
    // Predicated region
    $region42: #{char_self_att_forward.1} parent=1 // pred_check
      _
    $region43: #{char_self_att_forward.1} parent=1 // pred_check_branch
      %732 = sbr.rel (0) target = $region45
    $region44: #{char_self_att_forward.1} parent=1 // pred_region
      %734 = dma.done [#allocation5], 32
    $region45: #{char_self_att_forward.1} parent=1 // pred_fallthru
      _
    %735 = vsyncpa [#allocation4], 1
    %736 = vsyncpa [#allocation5], 1

</llo_original>
